<compile_context>
chip_gen: v7x
topology: tpu7x:2x2x1
jax: 0.10.0
libtpu: 0.0.40
codegen_flags: <defaults>
</compile_context>

<pallas_src>
import jax
import jax.numpy as jnp
from jax.experimental import pallas as pl
from jax.experimental.pallas import tpu as pltpu


def _classifier_mlp_kernel(xt_ref, w1_ref, b1_ref, w2_ref, b2_ref,
                           w3_ref, b3_ref, o_ref):
    # xt_ref: (2, TILE_B)   -- row 0 = x, row 1 = t, batch on the lane axis
    # w1: (32, 2), b1: (32, 1), w2: (32, 32), b2: (32, 1)
    # w3: (n_cat, 32), b3: (n_cat, 1), o_ref: (n_cat, TILE_B)
    xt = xt_ref[...]
    w1 = w1_ref[...]

    # ---- Layer 1 (in_features = 2): pure VPU broadcast FMAs, no MXU. ----
    h = (w1[:, 0:1] * xt[0:1, :]          # (32,1) * (1,TILE_B) -> (32,TILE_B)
         + w1[:, 1:2] * xt[1:2, :]
         + b1_ref[...])
    h = h * jax.nn.sigmoid(h)              # SiLU (sigmoid on the EUP slot)

    # ---- Layer 2: (32,32) @ (32,TILE_B) on the MXU, f32 accumulation. ----
    h = jnp.dot(w2_ref[...], h, preferred_element_type=jnp.float32) + b2_ref[...]
    h = h * jax.nn.sigmoid(h)

    # ---- Layer 3: (n_cat,32) @ (32,TILE_B) -> lane-dense output store. ----
    out = jnp.dot(w3_ref[...], h, preferred_element_type=jnp.float32) + b3_ref[...]
    o_ref[...] = out.astype(o_ref.dtype)


def classifier_forward(x, t, params, *, tile_b=1024):
    """x: (B, 1) float32, t: (B, 1) float32 -> logits (B, n_categories)."""
    w1, b1, w2, b2, w3, b3 = params        # PyTorch layout: W (out,in), b (out,)
    B = x.shape[0]
    n_cat = w3.shape[0]

    # Tile size: multiple of 128 (batch sits on the lane axis); don't over-pad
    # tiny batches.
    tile_b = max(128, min(tile_b, 128 * pl.cdiv(B, 128)))
    n_tiles = pl.cdiv(B, tile_b)
    b_pad = n_tiles * tile_b

    # Lane-dense stacked input: (2, B_pad) -- one DMA per tile for both x & t.
    xt = jnp.concatenate(
        [x.reshape(1, -1).astype(jnp.float32),
         t.reshape(1, -1).astype(jnp.float32)], axis=0)
    xt = jnp.pad(xt, ((0, 0), (0, b_pad - B)))

    # Biases as column vectors for the transposed compute.
    b1c = b1.reshape(-1, 1).astype(jnp.float32)
    b2c = b2.reshape(-1, 1).astype(jnp.float32)
    b3c = b3.reshape(-1, 1).astype(jnp.float32)

    const = lambda shape: pl.BlockSpec(shape, lambda i: (0, 0))  # VMEM-resident

    out_t = pl.pallas_call(
        _classifier_mlp_kernel,
        out_shape=jax.ShapeDtypeStruct((n_cat, b_pad), jnp.float32),
        grid=(n_tiles,),
        in_specs=[
            pl.BlockSpec((2, tile_b), lambda i: (0, i)),   # xt (2, B_pad)
            const(w1.shape),               # w1 (32, 2)
            const(b1c.shape),              # b1 (32, 1)
            const(w2.shape),               # w2 (32, 32)
            const(b2c.shape),              # b2 (32, 1)
            const(w3.shape),               # w3 (n_cat, 32)
            const(b3c.shape),              # b3 (n_cat, 1)
        ],
        out_specs=pl.BlockSpec((n_cat, tile_b), lambda i: (0, i)),
        compiler_params=pltpu.CompilerParams(
            dimension_semantics=("parallel",)),
    )(xt, w1.astype(jnp.float32), b1c, w2.astype(jnp.float32), b2c,
      w3.astype(jnp.float32), b3c)

    # Back to the caller-facing (B, n_cat) orientation.
    return out_t[:, :B].T


def init_params(key, n_categories=3):
    """PyTorch nn.Linear-style init: W (out,in), b (out,), U(-1/sqrt(fan_in), +)."""
    ks = jax.random.split(key, 6)

    def lin(kw, kb, fan_in, fan_out):
        bound = 1.0 / jnp.sqrt(jnp.float32(fan_in))
        w = jax.random.uniform(kw, (fan_out, fan_in), jnp.float32, -bound, bound)
        b = jax.random.uniform(kb, (fan_out,), jnp.float32, -bound, bound)
        return w, b

    w1, b1 = lin(ks[0], ks[1], 2, 32)
    w2, b2 = lin(ks[2], ks[3], 32, 32)
    w3, b3 = lin(ks[4], ks[5], 32, n_categories)
    return (w1, b1, w2, b2, w3, b3)


def _reference_forward(x, t, params):
    w1, b1, w2, b2, w3, b3 = params
    hp = jax.lax.Precision.HIGHEST
    h = jnp.concatenate([x, t], -1)
    h = jax.nn.silu(jnp.dot(h, w1.T, precision=hp) + b1)
    h = jax.nn.silu(jnp.dot(h, w2.T, precision=hp) + b2)
    return jnp.dot(h, w3.T, precision=hp) + b3


# TODO(synk): loss / logp / gradients / optimizer update of the PyTorch module are
# training utilities outside the forward pass and are not implemented here.

if __name__ == "__main__":
    key = jax.random.PRNGKey(0)
    k_x, k_t, k_p = jax.random.split(key, 3)

    B = 8
    n_categories = 3
    x = jax.random.normal(k_x, (B, 1), jnp.float32)    # data coordinate
    t = jax.random.uniform(k_t, (B, 1), jnp.float32)   # diffusion time
    params = init_params(k_p, n_categories)

    logits = classifier_forward(x, t, params)
    jax.block_until_ready(logits)

    ref = _reference_forward(x, t, params)
    assert logits.shape == (B, n_categories)
    assert jnp.allclose(logits, ref, atol=1e-5, rtol=1e-5)

    print("KERNEL_OK")
</pallas_src>

<mosaic_0001>
module attributes {stable_mosaic.version = 11 : i64} {
  func.func @_classifier_mlp_kernel(%arg0: i32, %arg1: memref<2x128xf32, #tpu.memory_space<vmem>>, %arg2: memref<32x2xf32, #tpu.memory_space<vmem>>, %arg3: memref<32x1xf32, #tpu.memory_space<vmem>>, %arg4: memref<32x32xf32, #tpu.memory_space<vmem>>, %arg5: memref<32x1xf32, #tpu.memory_space<vmem>>, %arg6: memref<3x32xf32, #tpu.memory_space<vmem>>, %arg7: memref<3x1xf32, #tpu.memory_space<vmem>>, %arg8: memref<3x128xf32, #tpu.memory_space<vmem>>) attributes {dimension_semantics = [#tpu.dimension_semantics<parallel>], iteration_bounds = array<i64: 1>, scalar_prefetch = 0 : i64, scratch_operands = 0 : i64, tpu.core_type = #tpu.core_type<tc>, window_params = [{transform_indices = @transform_0, window_bounds = array<i64: 2, 128>}, {pipeline_mode = #tpu.pipeline_mode<synchronous>, transform_indices = @transform_1, window_bounds = array<i64: 32, 2>}, {pipeline_mode = #tpu.pipeline_mode<synchronous>, transform_indices = @transform_2, window_bounds = array<i64: 32, 1>}, {pipeline_mode = #tpu.pipeline_mode<synchronous>, transform_indices = @transform_3, window_bounds = array<i64: 32, 32>}, {pipeline_mode = #tpu.pipeline_mode<synchronous>, transform_indices = @transform_4, window_bounds = array<i64: 32, 1>}, {pipeline_mode = #tpu.pipeline_mode<synchronous>, transform_indices = @transform_5, window_bounds = array<i64: 3, 32>}, {pipeline_mode = #tpu.pipeline_mode<synchronous>, transform_indices = @transform_6, window_bounds = array<i64: 3, 1>}, {transform_indices = @transform_7, window_bounds = array<i64: 3, 128>}]} {
    %c0 = arith.constant 0 : index
    %c0_0 = arith.constant 0 : index
    %0 = vector.load %arg1[%c0, %c0_0] : memref<2x128xf32, #tpu.memory_space<vmem>>, vector<2x128xf32>
    %c0_1 = arith.constant 0 : index
    %c0_2 = arith.constant 0 : index
    %1 = vector.load %arg2[%c0_1, %c0_2] : memref<32x2xf32, #tpu.memory_space<vmem>>, vector<32x2xf32>
    %2 = vector.extract_strided_slice %1 {offsets = [0, 0], sizes = [32, 1], strides = [1, 1]} : vector<32x2xf32> to vector<32x1xf32>
    %3 = vector.extract_strided_slice %0 {offsets = [0, 0], sizes = [1, 128], strides = [1, 1]} : vector<2x128xf32> to vector<1x128xf32>
    %4 = vector.broadcast %2 : vector<32x1xf32> to vector<32x128xf32>
    %5 = vector.broadcast %3 : vector<1x128xf32> to vector<32x128xf32>
    %6 = arith.mulf %4, %5 : vector<32x128xf32>
    %7 = vector.extract_strided_slice %1 {offsets = [0, 1], sizes = [32, 1], strides = [1, 1]} : vector<32x2xf32> to vector<32x1xf32>
    %8 = vector.extract_strided_slice %0 {offsets = [1, 0], sizes = [1, 128], strides = [1, 1]} : vector<2x128xf32> to vector<1x128xf32>
    %9 = vector.broadcast %7 : vector<32x1xf32> to vector<32x128xf32>
    %10 = vector.broadcast %8 : vector<1x128xf32> to vector<32x128xf32>
    %11 = arith.mulf %9, %10 : vector<32x128xf32>
    %12 = arith.addf %6, %11 : vector<32x128xf32>
    %c0_3 = arith.constant 0 : index
    %c0_4 = arith.constant 0 : index
    %13 = vector.load %arg3[%c0_3, %c0_4] : memref<32x1xf32, #tpu.memory_space<vmem>>, vector<32x1xf32>
    %14 = vector.broadcast %13 : vector<32x1xf32> to vector<32x128xf32>
    %15 = arith.addf %12, %14 : vector<32x128xf32>
    %16 = arith.negf %15 : vector<32x128xf32>
    %17 = math.exp %16 : vector<32x128xf32>
    %cst = arith.constant 1.000000e+00 : f32
    %18 = vector.broadcast %cst : f32 to vector<32x128xf32>
    %19 = arith.addf %18, %17 : vector<32x128xf32>
    %20 = arith.divf %18, %19 : vector<32x128xf32>
    %21 = arith.mulf %15, %20 : vector<32x128xf32>
    %c0_5 = arith.constant 0 : index
    %c0_6 = arith.constant 0 : index
    %22 = vector.load %arg4[%c0_5, %c0_6] : memref<32x32xf32, #tpu.memory_space<vmem>>, vector<32x32xf32>
    %cst_7 = arith.constant dense<0.000000e+00> : vector<32x128xf32>
    %23 = tpu.matmul %22, %21, %cst_7 {dimension_numbers = #tpu.dot_dimension_numbers<[1], [0], [0], [1], [0, 0, 1, 1], [], []>} : vector<32x32xf32>, vector<32x128xf32>, vector<32x128xf32> -> vector<32x128xf32>
    %c0_8 = arith.constant 0 : index
    %c0_9 = arith.constant 0 : index
    %24 = vector.load %arg5[%c0_8, %c0_9] : memref<32x1xf32, #tpu.memory_space<vmem>>, vector<32x1xf32>
    %25 = vector.broadcast %24 : vector<32x1xf32> to vector<32x128xf32>
    %26 = arith.addf %23, %25 : vector<32x128xf32>
    %27 = arith.negf %26 : vector<32x128xf32>
    %28 = math.exp %27 : vector<32x128xf32>
    %cst_10 = arith.constant 1.000000e+00 : f32
    %29 = vector.broadcast %cst_10 : f32 to vector<32x128xf32>
    %30 = arith.addf %29, %28 : vector<32x128xf32>
    %31 = arith.divf %29, %30 : vector<32x128xf32>
    %32 = arith.mulf %26, %31 : vector<32x128xf32>
    %c0_11 = arith.constant 0 : index
    %c0_12 = arith.constant 0 : index
    %33 = vector.load %arg6[%c0_11, %c0_12] : memref<3x32xf32, #tpu.memory_space<vmem>>, vector<3x32xf32>
    %cst_13 = arith.constant dense<0.000000e+00> : vector<3x128xf32>
    %34 = tpu.matmul %33, %32, %cst_13 {dimension_numbers = #tpu.dot_dimension_numbers<[1], [0], [0], [1], [0, 0, 1, 1], [], []>} : vector<3x32xf32>, vector<32x128xf32>, vector<3x128xf32> -> vector<3x128xf32>
    %c0_14 = arith.constant 0 : index
    %c0_15 = arith.constant 0 : index
    %35 = vector.load %arg7[%c0_14, %c0_15] : memref<3x1xf32, #tpu.memory_space<vmem>>, vector<3x1xf32>
    %36 = vector.broadcast %35 : vector<3x1xf32> to vector<3x128xf32>
    %37 = arith.addf %34, %36 : vector<3x128xf32>
    %c0_16 = arith.constant 0 : index
    %c0_17 = arith.constant 0 : index
    %38 = vector.load %arg8[%c0_16, %c0_17] : memref<3x128xf32, #tpu.memory_space<vmem>>, vector<3x128xf32>
    tpu.vector_store %arg8[%c0_16, %c0_17], %37 {strides = array<i32>} : memref<3x128xf32, #tpu.memory_space<vmem>>, vector<3x128xf32>,
    return
  }
  func.func @transform_0(%arg0: i32) -> (i32, i32) {
    %c0_i32 = arith.constant 0 : i32
    %c0_i32_0 = arith.constant 0 : i32
    return %c0_i32, %arg0 : i32, i32
  }
  func.func @transform_1(%arg0: i32) -> (i32, i32) {
    %c0_i32 = arith.constant 0 : i32
    %c0_i32_0 = arith.constant 0 : i32
    %c0_i32_1 = arith.constant 0 : i32
    return %c0_i32, %c0_i32_0 : i32, i32
  }
  func.func @transform_2(%arg0: i32) -> (i32, i32) {
    %c0_i32 = arith.constant 0 : i32
    %c0_i32_0 = arith.constant 0 : i32
    %c0_i32_1 = arith.constant 0 : i32
    return %c0_i32, %c0_i32_0 : i32, i32
  }
  func.func @transform_3(%arg0: i32) -> (i32, i32) {
    %c0_i32 = arith.constant 0 : i32
    %c0_i32_0 = arith.constant 0 : i32
    %c0_i32_1 = arith.constant 0 : i32
    return %c0_i32, %c0_i32_0 : i32, i32
  }
  func.func @transform_4(%arg0: i32) -> (i32, i32) {
    %c0_i32 = arith.constant 0 : i32
    %c0_i32_0 = arith.constant 0 : i32
    %c0_i32_1 = arith.constant 0 : i32
    return %c0_i32, %c0_i32_0 : i32, i32
  }
  func.func @transform_5(%arg0: i32) -> (i32, i32) {
    %c0_i32 = arith.constant 0 : i32
    %c0_i32_0 = arith.constant 0 : i32
    %c0_i32_1 = arith.constant 0 : i32
    return %c0_i32, %c0_i32_0 : i32, i32
  }
  func.func @transform_6(%arg0: i32) -> (i32, i32) {
    %c0_i32 = arith.constant 0 : i32
    %c0_i32_0 = arith.constant 0 : i32
    %c0_i32_1 = arith.constant 0 : i32
    return %c0_i32, %c0_i32_0 : i32, i32
  }
  func.func @transform_7(%arg0: i32) -> (i32, i32) {
    %c0_i32 = arith.constant 0 : i32
    %c0_i32_0 = arith.constant 0 : i32
    return %c0_i32, %arg0 : i32, i32
  }
}

</mosaic_0001>

<llo_original>
// kernel: tpu_custom_call.1
$region0: #{tpu_custom_call.1}
  #allocation0 [shape = 'u32[]', space=smem, size = 0x4, offset = 0x4, fixed_abs, tag = 'smem constant byte address 0x4 - core index']
  #allocation1 [shape = 'u32[144,128]{1,0:T(1,128)}', space=vmem, size = 0x12000, scoped, tag = 'internal scratch']
  %s0 = inlined_call_operand.vmem [shape: f32[2,128], index: 0, kind: input, shape index: {}]
  %s1 = inlined_call_operand.vmem [shape: f32[32,2], index: 1, kind: input, shape index: {}]
  %s2 = inlined_call_operand.vmem [shape: f32[32,1], index: 2, kind: input, shape index: {}]
  %s3 = inlined_call_operand.vmem [shape: f32[32,32], index: 3, kind: input, shape index: {}]
  %s4 = inlined_call_operand.vmem [shape: f32[32,1], index: 4, kind: input, shape index: {}]
  %s5 = inlined_call_operand.vmem [shape: f32[3,32], index: 5, kind: input, shape index: {}]
  %s6 = inlined_call_operand.vmem [shape: f32[3,1], index: 6, kind: input, shape index: {}]
  %s7 = inlined_call_operand.hbm [shape: f32[3,128], index: 7, kind: output, shape index: {}]
  %s8 = sld [smem:[#allocation0]]
  $region38: #{tpu_custom_call.1} parent=0
    _
  %s10 = ssub.s32 1, %s8
  %s11 = scalar_select 0, %s10, %s8
  $region1: #{tpu_custom_call.1} parent=0
    #allocation2 [shape = 'u8[2048]{0}', space=vmem, size = 0x800, scoped, tag = 'output window, operand 0, single buffered']
    #allocation3 [shape = 's32[1]{0}', space=sflag, size = 0x4, scoped, tag = 'scoped memory for tpu_custom_call.1']
    %12 = vsyncpa [#allocation3], 0
    // Predicated region
    $region2: #{tpu_custom_call.1} parent=1 // pred_check
      _
    $region3: #{tpu_custom_call.1} parent=1 // pred_check_branch
      %14 = sbr.rel (0) target = $region5
    $region4: #{tpu_custom_call.1} parent=1 // pred_region
      _
    $region5: #{tpu_custom_call.1} parent=1 // pred_fallthru
      _
    // Predicated region
    $region6: #{tpu_custom_call.1} parent=1 // pred_check
      _
    $region7: #{tpu_custom_call.1} parent=1 // pred_check_branch
      %16 = sbr.rel (0) target = $region9
    $region8: #{tpu_custom_call.1} parent=1 // pred_region
      _
    $region9: #{tpu_custom_call.1} parent=1 // pred_fallthru
      _
    // Predicated region
    $region10: #{tpu_custom_call.1} parent=1 // pred_check
      _
    $region11: #{tpu_custom_call.1} parent=1 // pred_check_branch
      %18 = sbr.rel (0) target = $region13
    $region12: #{tpu_custom_call.1} parent=1 // pred_region
      _
    $region13: #{tpu_custom_call.1} parent=1 // pred_fallthru
      _
    // Predicated region
    $region14: #{tpu_custom_call.1} parent=1 // pred_check
      _
    $region15: #{tpu_custom_call.1} parent=1 // pred_check_branch
      %20 = sbr.rel (0) target = $region17
    $region16: #{tpu_custom_call.1} parent=1 // pred_region
      _
    $region17: #{tpu_custom_call.1} parent=1 // pred_fallthru
      _
    // Predicated region
    $region18: #{tpu_custom_call.1} parent=1 // pred_check
      _
    $region19: #{tpu_custom_call.1} parent=1 // pred_check_branch
      %22 = sbr.rel (0) target = $region21
    $region20: #{tpu_custom_call.1} parent=1 // pred_region
      _
    $region21: #{tpu_custom_call.1} parent=1 // pred_fallthru
      _
    // Predicated region
    $region22: #{tpu_custom_call.1} parent=1 // pred_check
      _
    $region23: #{tpu_custom_call.1} parent=1 // pred_check_branch
      %24 = sbr.rel (0) target = $region25
    $region24: #{tpu_custom_call.1} parent=1 // pred_region
      _
    $region25: #{tpu_custom_call.1} parent=1 // pred_fallthru
      _
    // Predicated region
    $region26: #{tpu_custom_call.1} parent=1 // pred_check
      _
    $region27: #{tpu_custom_call.1} parent=1 // pred_check_branch
      %26 = sbr.rel (0) target = $region29
    $region28: #{tpu_custom_call.1} parent=1 // pred_region
      _
    $region29: #{tpu_custom_call.1} parent=1 // pred_fallthru
      _
    %v27 = vld [vmem:[%s0] sm:$0x3]
    %v28 = vld [vmem:[%s1] sm:$0xff]
    %v29 = vld [vmem:[%s1 + $0x8] sm:$0xff]
    %v30 = vld [vmem:[%s1 + $0x10] sm:$0xff]
    %v31 = vld [vmem:[%s1 + $0x18] sm:$0xff]
    %33 = vset.pattern.permute.xlu0 0
    %34 = vperm.xlu0 %33, %v28
    %v35 = vpop.permute.xlu0 %34
    %38 = vset.pattern.permute.xlu0 0
    %39 = vperm.xlu0 %38, %v29
    %v40 = vpop.permute.xlu0 %39
    %43 = vset.pattern.permute.xlu0 0
    %44 = vperm.xlu0 %43, %v30
    %v45 = vpop.permute.xlu0 %44
    %48 = vset.pattern.permute.xlu0 0
    %49 = vperm.xlu0 %48, %v31
    %v50 = vpop.permute.xlu0 %49
    %v52 = vlaneseq
    %v53 = vshrl.u32 %v52, 7
    %v54 = vsub.s32 0, %v53
    %v55 = vrot.slane %v27, %v54
    %v56 = vmul.f32 %v35, %v55
    %v57 = vmul.f32 %v40, %v55
    %v58 = vmul.f32 %v45, %v55
    %v59 = vmul.f32 %v50, %v55
    %60 = vset.pattern.permute.xlu0 1
    %61 = vperm.xlu0 %60, %v28
    %v62 = vpop.permute.xlu0 %61
    %64 = vset.pattern.permute.xlu0 1
    %65 = vperm.xlu0 %64, %v29
    %v66 = vpop.permute.xlu0 %65
    %68 = vset.pattern.permute.xlu0 1
    %69 = vperm.xlu0 %68, %v30
    %v70 = vpop.permute.xlu0 %69
    %72 = vset.pattern.permute.xlu0 1
    %73 = vperm.xlu0 %72, %v31
    %v74 = vpop.permute.xlu0 %73
    %v76 = vlaneseq
    %v77 = vshrl.u32 %v76, 7
    %v78 = vsub.s32 1, %v77
    %v79 = vrot.slane %v27, %v78
    %v80 = vmul.f32 %v62, %v79
    %v81 = vmul.f32 %v66, %v79
    %v82 = vmul.f32 %v70, %v79
    %v83 = vmul.f32 %v74, %v79
    %v84 = vadd.f32 %v56, %v80
    %v85 = vadd.f32 %v57, %v81
    %v86 = vadd.f32 %v58, %v82
    %v87 = vadd.f32 %v59, %v83
    %v88 = vld [vmem:[%s2] sm:$0xff]
    %v89 = vld [vmem:[%s2 + $0x8] sm:$0xff]
    %v90 = vld [vmem:[%s2 + $0x10] sm:$0xff]
    %v91 = vld [vmem:[%s2 + $0x18] sm:$0xff]
    %93 = vset.pattern.permute.xlu0 0
    %94 = vperm.xlu0 %93, %v88
    %v95 = vpop.permute.xlu0 %94
    %98 = vset.pattern.permute.xlu0 0
    %99 = vperm.xlu0 %98, %v89
    %v100 = vpop.permute.xlu0 %99
    %103 = vset.pattern.permute.xlu0 0
    %104 = vperm.xlu0 %103, %v90
    %v105 = vpop.permute.xlu0 %104
    %108 = vset.pattern.permute.xlu0 0
    %109 = vperm.xlu0 %108, %v91
    %v110 = vpop.permute.xlu0 %109
    %v112 = vadd.f32 %v84, %v95
    %v113 = vadd.f32 %v85, %v100
    %v114 = vadd.f32 %v86, %v105
    %v115 = vadd.f32 %v87, %v110
    %v116 = vxor.u32 %v112, 2147483648
    %v117 = vxor.u32 %v113, 2147483648
    %v118 = vxor.u32 %v114, 2147483648
    %v119 = vxor.u32 %v115, 2147483648
    %v120 = vmul.f32 %v116, 1.442695
    %v121 = vpow.pop %v120
    %v122 = vmul.f32 %v117, 1.442695
    %v123 = vpow.pop %v122
    %v124 = vmul.f32 %v118, 1.442695
    %v125 = vpow.pop %v124
    %v126 = vmul.f32 %v119, 1.442695
    %v127 = vpow.pop %v126
    %v128 = vadd.f32 %v121, 1.0
    %v129 = vadd.f32 %v123, 1.0
    %v130 = vadd.f32 %v125, 1.0
    %v131 = vadd.f32 %v127, 1.0
    %v132 = vrcp.pop %v128
    %v133 = vmul.f32 1.0, %v132
    %v134 = vrcp.pop %v129
    %v135 = vmul.f32 1.0, %v134
    %v136 = vrcp.pop %v130
    %v137 = vmul.f32 1.0, %v136
    %v138 = vrcp.pop %v131
    %v139 = vmul.f32 1.0, %v138
    %v140 = vmul.f32 %v112, %v133
    %v141 = vmul.f32 %v113, %v135
    %v142 = vmul.f32 %v114, %v137
    %v143 = vmul.f32 %v115, %v139
    %v144 = vld [vmem:[%s3] sm:$0xff]
    %v145 = vld [vmem:[%s3 + $0x8] sm:$0xff]
    %v146 = vld [vmem:[%s3 + $0x10] sm:$0xff]
    %v147 = vld [vmem:[%s3 + $0x18] sm:$0xff]
    %v148 = vld [vmem:[%s4] sm:$0xff]
    %v149 = vld [vmem:[%s4 + $0x8] sm:$0xff]
    %v150 = vld [vmem:[%s4 + $0x10] sm:$0xff]
    %v151 = vld [vmem:[%s4 + $0x18] sm:$0xff]
    %153 = vset.pattern.permute.xlu0 0
    %154 = vperm.xlu0 %153, %v148
    %v155 = vpop.permute.xlu0 %154
    %158 = vset.pattern.permute.xlu0 0
    %159 = vperm.xlu0 %158, %v149
    %v160 = vpop.permute.xlu0 %159
    %163 = vset.pattern.permute.xlu0 0
    %164 = vperm.xlu0 %163, %v150
    %v165 = vpop.permute.xlu0 %164
    %168 = vset.pattern.permute.xlu0 0
    %169 = vperm.xlu0 %168, %v151
    %v170 = vpop.permute.xlu0 %169
    %vm172 = vcmask 261120
    %v174 = vsel %vm172, %v144, 0
    %v177 = vsel %vm172, %v145, 0
    %v180 = vsel %vm172, %v146, 0
    %v183 = vsel %vm172, %v147, 0
    %185 = vmatprep.subr.mxu0 0.0
    %186 = vmatpush1.msra.mxu0 %v140
    %187 = vmatprep.subr.mxu0 0.0
    %188 = vmatpush1.msra.mxu0 %v141
    %189 = vmatprep.subr.mxu0 0.0
    %190 = vmatpush1.msra.mxu0 %v142
    %191 = vmatprep.subr.mxu0 0.0
    %192 = vmatpush1.msra.mxu0 %v143
    %193 = vmatprep.subr.mxu0 0.0
    %194 = vmatpush1.msra.mxu0 0.0
    %195 = vmatprep.subr.mxu0 0.0
    %196 = vmatpush1.msra.mxu0 0.0
    %197 = vmatprep.subr.mxu0 0.0
    %198 = vmatpush1.msra.mxu0 0.0
    %199 = vmatprep.subr.mxu0 0.0
    %200 = vmatpush1.msra.mxu0 0.0
    %201 = vmatprep.subr.mxu0 0.0
    %202 = vmatpush1.msra.mxu0 0.0
    %203 = vmatprep.subr.mxu0 0.0
    %204 = vmatpush1.msra.mxu0 0.0
    %205 = vmatprep.subr.mxu0 0.0
    %206 = vmatpush1.msra.mxu0 0.0
    %207 = vmatprep.subr.mxu0 0.0
    %208 = vmatpush1.msra.mxu0 0.0
    %209 = vmatprep.subr.mxu0 0.0
    %210 = vmatpush1.msra.mxu0 0.0
    %211 = vmatprep.subr.mxu0 0.0
    %212 = vmatpush1.msra.mxu0 0.0
    %213 = vmatprep.subr.mxu0 0.0
    %214 = vmatpush1.msra.mxu0 0.0
    %215 = vmatprep.subr.mxu0 0.0
    %216 = vmatpush1.msra.mxu0 0.0
    %217 = vmatprep.subr.mxu0 0.0
    %218 = vmatpush1.msra.mxu0 0.0
    %219 = vmatprep.subr.mxu0 0.0
    %220 = vmatpush1.msra.mxu0 0.0
    %221 = vmatprep.subr.mxu0 0.0
    %222 = vmatpush1.msra.mxu0 0.0
    %223 = vmatprep.subr.mxu0 0.0
    %224 = vmatpush1.msra.mxu0 0.0
    %225 = vmatprep.subr.mxu0 0.0
    %226 = vmatpush1.msra.mxu0 0.0
    %227 = vmatprep.subr.mxu0 0.0
    %228 = vmatpush1.msra.mxu0 0.0
    %229 = vmatprep.subr.mxu0 0.0
    %230 = vmatpush1.msra.mxu0 0.0
    %231 = vmatprep.subr.mxu0 0.0
    %232 = vmatpush1.msra.mxu0 0.0
    %233 = vmatprep.subr.mxu0 0.0
    %234 = vmatpush1.msra.mxu0 0.0
    %235 = vmatprep.subr.mxu0 0.0
    %236 = vmatpush1.msra.mxu0 0.0
    %237 = vmatprep.subr.mxu0 0.0
    %238 = vmatpush1.msra.mxu0 0.0
    %239 = vmatprep.subr.mxu0 0.0
    %240 = vmatpush1.msra.mxu0 0.0
    %241 = vmatprep.subr.mxu0 0.0
    %242 = vmatpush1.msra.mxu0 0.0
    %243 = vmatprep.subr.mxu0 0.0
    %244 = vmatpush1.msra.mxu0 0.0
    %245 = vmatprep.subr.mxu0 0.0
    %246 = vmatpush1.msra.mxu0 0.0
    %247 = vmatprep.subr.mxu0 0.0
    %248 = vmatpush1.msra.mxu0 0.0
    %249 = vmatprep.mubr.f32.mxu0 0.0
    %250 = vmatmul.mubr.f32.gmra.mrb[0].mxu0 %v174
    %v251 = vpop.f32.mrb[0].mxu0
    %v252 = vadd.f32 %v155, %v251
    %v253 = vpop.f32.mrb[0].mxu0
    %254 = vmatprep.mubr.f32.mxu0 0.0
    %255 = vmatmul.mubr.f32.gmra.mrb[0].mxu0 %v177
    %v256 = vpop.f32.mrb[0].mxu0
    %v257 = vadd.f32 %v160, %v256
    %v258 = vpop.f32.mrb[0].mxu0
    %259 = vmatprep.mubr.f32.mxu0 0.0
    %260 = vmatmul.mubr.f32.gmra.mrb[0].mxu0 %v180
    %v261 = vpop.f32.mrb[0].mxu0
    %v262 = vadd.f32 %v165, %v261
    %v263 = vpop.f32.mrb[0].mxu0
    %264 = vmatprep.mubr.f32.mxu0 0.0
    %265 = vmatmul.mubr.f32.gmra.mrb[0].mxu0 %v183
    %v266 = vpop.f32.mrb[0].mxu0
    %v267 = vadd.f32 %v170, %v266
    %v268 = vpop.f32.mrb[0].mxu0
    %269 = vdwg.mxu0
    %v270 = vxor.u32 %v252, 2147483648
    %v271 = vxor.u32 %v257, 2147483648
    %v272 = vxor.u32 %v262, 2147483648
    %v273 = vxor.u32 %v267, 2147483648
    %v274 = vmul.f32 %v270, 1.442695
    %v275 = vpow.pop %v274
    %v276 = vmul.f32 %v271, 1.442695
    %v277 = vpow.pop %v276
    %v278 = vmul.f32 %v272, 1.442695
    %v279 = vpow.pop %v278
    %v280 = vmul.f32 %v273, 1.442695
    %v281 = vpow.pop %v280
    %v282 = vadd.f32 %v275, 1.0
    %v283 = vadd.f32 %v277, 1.0
    %v284 = vadd.f32 %v279, 1.0
    %v285 = vadd.f32 %v281, 1.0
    %v286 = vrcp.pop %v282
    %v287 = vmul.f32 1.0, %v286
    %v288 = vrcp.pop %v283
    %v289 = vmul.f32 1.0, %v288
    %v290 = vrcp.pop %v284
    %v291 = vmul.f32 1.0, %v290
    %v292 = vrcp.pop %v285
    %v293 = vmul.f32 1.0, %v292
    %v294 = vmul.f32 %v252, %v287
    %v295 = vmul.f32 %v257, %v289
    %v296 = vmul.f32 %v262, %v291
    %v297 = vmul.f32 %v267, %v293
    %v298 = vld [vmem:[%s5] sm:$0x7]
    %v299 = vld [vmem:[%s6] sm:$0x7]
    %301 = vset.pattern.permute.xlu0 0
    %302 = vperm.xlu0 %301, %v299
    %v303 = vpop.permute.xlu0 %302
    %v306 = vsel %vm172, %v298, 0
    %308 = vmatprep.subr.mxu0 0.0
    %309 = vmatpush1.msra.mxu0 %v294
    %310 = vmatprep.subr.mxu0 0.0
    %311 = vmatpush1.msra.mxu0 %v295
    %312 = vmatprep.subr.mxu0 0.0
    %313 = vmatpush1.msra.mxu0 %v296
    %314 = vmatprep.subr.mxu0 0.0
    %315 = vmatpush1.msra.mxu0 %v297
    %316 = vmatprep.subr.mxu0 0.0
    %317 = vmatpush1.msra.mxu0 0.0
    %318 = vmatprep.subr.mxu0 0.0
    %319 = vmatpush1.msra.mxu0 0.0
    %320 = vmatprep.subr.mxu0 0.0
    %321 = vmatpush1.msra.mxu0 0.0
    %322 = vmatprep.subr.mxu0 0.0
    %323 = vmatpush1.msra.mxu0 0.0
    %324 = vmatprep.subr.mxu0 0.0
    %325 = vmatpush1.msra.mxu0 0.0
    %326 = vmatprep.subr.mxu0 0.0
    %327 = vmatpush1.msra.mxu0 0.0
    %328 = vmatprep.subr.mxu0 0.0
    %329 = vmatpush1.msra.mxu0 0.0
    %330 = vmatprep.subr.mxu0 0.0
    %331 = vmatpush1.msra.mxu0 0.0
    %332 = vmatprep.subr.mxu0 0.0
    %333 = vmatpush1.msra.mxu0 0.0
    %334 = vmatprep.subr.mxu0 0.0
    %335 = vmatpush1.msra.mxu0 0.0
    %336 = vmatprep.subr.mxu0 0.0
    %337 = vmatpush1.msra.mxu0 0.0
    %338 = vmatprep.subr.mxu0 0.0
    %339 = vmatpush1.msra.mxu0 0.0
    %340 = vmatprep.subr.mxu0 0.0
    %341 = vmatpush1.msra.mxu0 0.0
    %342 = vmatprep.subr.mxu0 0.0
    %343 = vmatpush1.msra.mxu0 0.0
    %344 = vmatprep.subr.mxu0 0.0
    %345 = vmatpush1.msra.mxu0 0.0
    %346 = vmatprep.subr.mxu0 0.0
    %347 = vmatpush1.msra.mxu0 0.0
    %348 = vmatprep.subr.mxu0 0.0
    %349 = vmatpush1.msra.mxu0 0.0
    %350 = vmatprep.subr.mxu0 0.0
    %351 = vmatpush1.msra.mxu0 0.0
    %352 = vmatprep.subr.mxu0 0.0
    %353 = vmatpush1.msra.mxu0 0.0
    %354 = vmatprep.subr.mxu0 0.0
    %355 = vmatpush1.msra.mxu0 0.0
    %356 = vmatprep.subr.mxu0 0.0
    %357 = vmatpush1.msra.mxu0 0.0
    %358 = vmatprep.subr.mxu0 0.0
    %359 = vmatpush1.msra.mxu0 0.0
    %360 = vmatprep.subr.mxu0 0.0
    %361 = vmatpush1.msra.mxu0 0.0
    %362 = vmatprep.subr.mxu0 0.0
    %363 = vmatpush1.msra.mxu0 0.0
    %364 = vmatprep.subr.mxu0 0.0
    %365 = vmatpush1.msra.mxu0 0.0
    %366 = vmatprep.subr.mxu0 0.0
    %367 = vmatpush1.msra.mxu0 0.0
    %368 = vmatprep.subr.mxu0 0.0
    %369 = vmatpush1.msra.mxu0 0.0
    %370 = vmatprep.subr.mxu0 0.0
    %371 = vmatpush1.msra.mxu0 0.0
    %372 = vmatprep.mubr.f32.mxu0 0.0
    %373 = vmatmul.mubr.f32.gmra.mrb[0].mxu0 %v306
    %v374 = vpop.f32.mrb[0].mxu0
    %v375 = vadd.f32 %v303, %v374
    %v376 = vpop.f32.mrb[0].mxu0
    %377 = vdwg.mxu0
    %378 = vst [vmem:[#allocation2] sm:$0x7] %v375
    // Predicated region
    $region30: #{tpu_custom_call.1} parent=1 // pred_check
      _
    $region31: #{tpu_custom_call.1} parent=1 // pred_check_branch
      %380 = sbr.rel (0) target = $region33
    $region32: #{tpu_custom_call.1} parent=1 // pred_region
      %s382 = ssub.s32 64, 64
      %383 = vsyncadd [#allocation3], %s382
      %s385 = sshll.u32 [#allocation2], 4
      %s386 = int_to_ptr.vmem [resolvable:$true] %s385
      %388 = dma.vmem_to_hbm [thread:$0]  %s386, 64, %s7, [#allocation3]
    $region33: #{tpu_custom_call.1} parent=1 // pred_fallthru
      _
    // Predicated region
    $region34: #{tpu_custom_call.1} parent=1 // pred_check
      _
    $region35: #{tpu_custom_call.1} parent=1 // pred_check_branch
      %390 = sbr.rel (0) target = $region37
    $region36: #{tpu_custom_call.1} parent=1 // pred_region
      %391 = dma.done [#allocation3], 64
    $region37: #{tpu_custom_call.1} parent=1 // pred_fallthru
      _
    %392 = vsyncpa [#allocation3], 1

</llo_original>
